<compile_context>
chip_gen: v6e
topology: v6e:2x2x1
jax: 0.10.0
libtpu: 0.0.40
codegen_flags: <defaults>
</compile_context>

<pallas_src>
import functools

import jax
import jax.numpy as jnp
from jax import lax
from jax.experimental import pallas as pl
from jax.experimental.pallas import tpu as pltpu


def _round_up(x, m):
    return ((x + m - 1) // m) * m


# ----------------------------------------------------------------------------
# Pallas kernel: the whole label-propagation fixed point, VMEM-resident.
# ----------------------------------------------------------------------------
def _lp_kernel(adj_ref, y_ref, out_ref, *, alpha, hops, num_iters):
    # Seeds stay in f32; the blend term is hoisted out of the iteration loop.
    y = y_ref[...]                       # (n_pad, c_pad) f32
    y_scaled = (1.0 - alpha) * y

    def one_iter(_, r):
        # `hops` is a small static int -> unrolled at trace time (MXU matmuls).
        # adj_ref is the loop-invariant bf16 adjacency, VMEM-resident; r is cast
        # to bf16 per hop, accumulation stays f32.
        for _ in range(hops):
            r = jnp.dot(
                adj_ref[...],
                r.astype(jnp.bfloat16),
                preferred_element_type=jnp.float32,
            )
        return alpha * r + y_scaled

    # r carried as a value across iterations; single store to HBM-bound out_ref.
    out_ref[...] = lax.fori_loop(0, num_iters, one_iter, y)


# ----------------------------------------------------------------------------
# Wrapper: pad to TPU-friendly shapes, one pallas_call, slice back.
# ----------------------------------------------------------------------------
def multi_lp(adj, y, *, alpha, hops, num_iters):
    """adj: (N, N) f32 normalized adjacency; y: (N, C) f32 seed labels."""
    n, c = y.shape
    assert adj.shape == (n, n)

    # K dim of every hop aligned to the 256-wide MXU tile (v6e/v7x); also a
    # multiple of 128 (v5e MXU) and 16 (bf16 sublane packing).
    n_pad = _round_up(n, 256)
    c_pad = _round_up(c, 128)   # lane-dense channels (unmasked stores, full MXU N)

    adj_p = jnp.pad(adj, ((0, n_pad - n), (0, n_pad - n))).astype(jnp.bfloat16)
    y_p = jnp.pad(y, ((0, n_pad - n), (0, c_pad - c))).astype(jnp.float32)

    # VMEM footprint: single-buffered specs (grid=(1,)) + in-kernel scratch for
    # the fori carry r and the hoisted (1-alpha)*y.
    buffer_count = 1
    adj_bytes = 2 * n_pad * n_pad            # bf16
    yo_bytes = 4 * n_pad * c_pad             # f32 (each of y, out)
    scratch_bytes = 2 * yo_bytes             # r carry + y_scaled
    footprint = buffer_count * (adj_bytes + 2 * yo_bytes) + scratch_bytes
    slack = 8 * 1024 * 1024                  # compiler-internal scratch headroom
    vmem_limit = footprint + slack
    # Leave headroom even on v7x's 64 MiB per-TC VMEM.
    assert vmem_limit <= 48 * 1024 * 1024, (
        f"dense A_hat footprint {footprint} B too large for VMEM; re-tile"
    )

    single = pl.Buffered(1)  # grid=(1,): double-buffering would be pure waste
    kernel = functools.partial(
        _lp_kernel, alpha=float(alpha), hops=int(hops), num_iters=int(num_iters)
    )
    out_p = pl.pallas_call(
        kernel,
        out_shape=jax.ShapeDtypeStruct((n_pad, c_pad), jnp.float32),
        grid_spec=pltpu.PrefetchScalarGridSpec(
            num_scalar_prefetch=0,
            grid=(1,),
            in_specs=[
                pl.BlockSpec((n_pad, n_pad), lambda i: (0, 0),
                             pipeline_mode=single),   # full A_hat, DMA'd once
                pl.BlockSpec((n_pad, c_pad), lambda i: (0, 0),
                             pipeline_mode=single),   # full y, DMA'd once
            ],
            out_specs=pl.BlockSpec((n_pad, c_pad), lambda i: (0, 0),
                                   pipeline_mode=single),
        ),
        compiler_params=pltpu.CompilerParams(
            dimension_semantics=("arbitrary",),
            vmem_limit_bytes=int(vmem_limit),
        ),
    )(adj_p, y_p)
    return out_p[:n, :c]


@functools.partial(jax.jit, static_argnames=("alpha", "hops", "num_iters"))
def multi_lp_jit(adj, y, *, alpha, hops, num_iters):
    return multi_lp(adj, y, alpha=alpha, hops=hops, num_iters=num_iters)


# ----------------------------------------------------------------------------
# Glue: normalized adjacency, seed-label construction, pure-JAX references.
# ----------------------------------------------------------------------------
def normalized_adjacency(edge_index, num_nodes):
    """Dense A_hat = D^{-1/2} (A + I) D^{-1/2}, messages flow src -> dst."""
    src, dst = edge_index[0], edge_index[1]
    a = jnp.zeros((num_nodes, num_nodes), jnp.float32)
    a = a.at[dst, src].add(1.0)
    a = a + jnp.eye(num_nodes, dtype=jnp.float32)
    deg = a.sum(axis=1)
    dinv = jnp.where(deg > 0, 1.0 / jnp.sqrt(deg), 0.0)
    return (dinv[:, None] * a) * dinv[None, :]


def seed_labels(labels, train_idx, num_nodes, out_channels):
    """y = zeros; y[train_idx] = one_hot(labels[train_idx], out_channels)."""
    y = jnp.zeros((num_nodes, out_channels), jnp.float32)
    onehot = jax.nn.one_hot(labels[train_idx], out_channels, dtype=jnp.float32)
    return y.at[train_idx].set(onehot)


def multi_lp_reference_f32(adj, y, *, alpha, hops, num_iters):
    r = y
    for _ in range(num_iters):
        for _ in range(hops):
            r = adj @ r
        r = alpha * r + (1.0 - alpha) * y
    return r


def multi_lp_reference_bf16(adj, y, *, alpha, hops, num_iters):
    """Matches the kernel's rounding: bf16 operands, f32 accumulate/blend."""
    adj_bf16 = adj.astype(jnp.bfloat16)
    r = y
    for _ in range(num_iters):
        for _ in range(hops):
            r = jnp.dot(adj_bf16, r.astype(jnp.bfloat16),
                        preferred_element_type=jnp.float32)
        r = alpha * r + (1.0 - alpha) * y
    return r


if __name__ == "__main__":
    N, E = 256, 1024
    OUT_C = 8
    ALPHA, HOPS, NUM_ITERS = 0.5, 2, 50

    key = jax.random.PRNGKey(0)
    k_src, k_dst, k_lab, k_tr = jax.random.split(key, 4)

    edge_index = jnp.stack(
        [
            jax.random.randint(k_src, (E,), 0, N),
            jax.random.randint(k_dst, (E,), 0, N),
        ]
    )
    labels = jax.random.randint(k_lab, (N,), 0, OUT_C)
    train_idx = jax.random.permutation(k_tr, N)[: N // 2]

    adj = normalized_adjacency(edge_index, N)
    y = seed_labels(labels, train_idx, N, OUT_C)

    out = multi_lp_jit(adj, y, alpha=ALPHA, hops=HOPS, num_iters=NUM_ITERS)
    out = jax.block_until_ready(out)
    assert out.shape == (N, OUT_C)

    # Tight check against a reference that uses the same bf16 operand rounding.
    ref_bf16 = multi_lp_reference_bf16(
        adj, y, alpha=ALPHA, hops=HOPS, num_iters=NUM_ITERS
    )
    err_bf16 = float(jnp.max(jnp.abs(out - ref_bf16)))
    assert jnp.allclose(out, ref_bf16, atol=1e-4, rtol=1e-4), err_bf16

    # Loose sanity check against the exact f32 reference (bf16 adjacency rounding
    # accumulates over num_iters * hops = 100 matmuls).
    ref_f32 = multi_lp_reference_f32(
        adj, y, alpha=ALPHA, hops=HOPS, num_iters=NUM_ITERS
    )
    err_f32 = float(jnp.max(jnp.abs(out - ref_f32)))
    assert err_f32 < 5e-2, err_f32

    print("KERNEL_OK")
</pallas_src>

<mosaic_0001>
module attributes {stable_mosaic.version = 11 : i64} {
  func.func @_lp_kernel(%arg0: i32, %arg1: memref<256x256xbf16, #tpu.memory_space<vmem>>, %arg2: memref<256x128xf32, #tpu.memory_space<vmem>>, %arg3: memref<256x128xf32, #tpu.memory_space<vmem>>) attributes {dimension_semantics = [#tpu.dimension_semantics<arbitrary>], iteration_bounds = array<i64: 1>, scalar_prefetch = 0 : i64, scratch_operands = 0 : i64, tpu.core_type = #tpu.core_type<tc>, window_params = [{pipeline_mode = #tpu.pipeline_mode<synchronous>, transform_indices = @transform_0, window_bounds = array<i64: 256, 256>}, {pipeline_mode = #tpu.pipeline_mode<synchronous>, transform_indices = @transform_1, window_bounds = array<i64: 256, 128>}, {pipeline_mode = #tpu.pipeline_mode<synchronous>, transform_indices = @transform_2, window_bounds = array<i64: 256, 128>}]} {
    %c0 = arith.constant 0 : index
    %c0_0 = arith.constant 0 : index
    %0 = vector.load %arg2[%c0, %c0_0] : memref<256x128xf32, #tpu.memory_space<vmem>>, vector<256x128xf32>
    %cst = arith.constant 5.000000e-01 : f32
    %1 = vector.broadcast %cst : f32 to vector<256x128xf32>
    %2 = arith.mulf %1, %0 : vector<256x128xf32>
    %c0_i32 = arith.constant 0 : i32
    %c50_i32 = arith.constant 50 : i32
    %3 = arith.addi %c0_i32, %c50_i32 : i32
    %c1_i32 = arith.constant 1 : i32
    %4 = scf.for %arg4 = %c0_i32 to %3 step %c1_i32 iter_args(%arg5 = %0) -> (vector<256x128xf32>)  : i32 {
      %c0_3 = arith.constant 0 : index
      %c0_4 = arith.constant 0 : index
      %6 = vector.load %arg1[%c0_3, %c0_4] : memref<256x256xbf16, #tpu.memory_space<vmem>>, vector<256x256xbf16>
      %7 = arith.truncf %arg5 : vector<256x128xf32> to vector<256x128xbf16>
      %cst_5 = arith.constant dense<0.000000e+00> : vector<256x128xf32>
      %8 = tpu.matmul %6, %7, %cst_5 {dimension_numbers = #tpu.dot_dimension_numbers<[1], [0], [0], [1], [0, 0, 1, 1], [], []>} : vector<256x256xbf16>, vector<256x128xbf16>, vector<256x128xf32> -> vector<256x128xf32>
      %c0_6 = arith.constant 0 : index
      %c0_7 = arith.constant 0 : index
      %9 = vector.load %arg1[%c0_6, %c0_7] : memref<256x256xbf16, #tpu.memory_space<vmem>>, vector<256x256xbf16>
      %10 = arith.truncf %8 : vector<256x128xf32> to vector<256x128xbf16>
      %cst_8 = arith.constant dense<0.000000e+00> : vector<256x128xf32>
      %11 = tpu.matmul %9, %10, %cst_8 {dimension_numbers = #tpu.dot_dimension_numbers<[1], [0], [0], [1], [0, 0, 1, 1], [], []>} : vector<256x256xbf16>, vector<256x128xbf16>, vector<256x128xf32> -> vector<256x128xf32>
      %cst_9 = arith.constant 5.000000e-01 : f32
      %12 = vector.broadcast %cst_9 : f32 to vector<256x128xf32>
      %13 = arith.mulf %12, %11 : vector<256x128xf32>
      %14 = arith.addf %13, %2 : vector<256x128xf32>
      scf.yield %14 : vector<256x128xf32>
    }
    %c0_1 = arith.constant 0 : index
    %c0_2 = arith.constant 0 : index
    %5 = vector.load %arg3[%c0_1, %c0_2] : memref<256x128xf32, #tpu.memory_space<vmem>>, vector<256x128xf32>
    tpu.vector_store %arg3[%c0_1, %c0_2], %4 {strides = array<i32>} : memref<256x128xf32, #tpu.memory_space<vmem>>, vector<256x128xf32>,
    return
  }
  func.func @transform_0(%arg0: i32) -> (i32, i32) {
    %c0_i32 = arith.constant 0 : i32
    %c0_i32_0 = arith.constant 0 : i32
    %c0_i32_1 = arith.constant 0 : i32
    return %c0_i32, %c0_i32_0 : i32, i32
  }
  func.func @transform_1(%arg0: i32) -> (i32, i32) {
    %c0_i32 = arith.constant 0 : i32
    %c0_i32_0 = arith.constant 0 : i32
    %c0_i32_1 = arith.constant 0 : i32
    return %c0_i32, %c0_i32_0 : i32, i32
  }
  func.func @transform_2(%arg0: i32) -> (i32, i32) {
    %c0_i32 = arith.constant 0 : i32
    %c0_i32_0 = arith.constant 0 : i32
    %c0_i32_1 = arith.constant 0 : i32
    return %c0_i32, %c0_i32_0 : i32, i32
  }
}

</mosaic_0001>

<llo_original>
// kernel: multi_lp_jit.1
$region0: #{multi_lp_jit.1}
  #allocation0 [shape = 'u32[]', space=smem, size = 0x4, offset = 0x4, fixed_abs, tag = 'smem constant byte address 0x4 - core index']
  #allocation1 [shape = 'u32[144,128]{1,0:T(1,128)}', space=vmem, size = 0x12000, scoped, tag = 'internal scratch']
  %s0 = inlined_call_operand.vmem [shape: bf16[256,256], index: 0, kind: input, shape index: {}]
  %s1 = inlined_call_operand.vmem [shape: f32[256,128], index: 1, kind: input, shape index: {}]
  %s2 = inlined_call_operand.vmem [shape: f32[256,128], index: 2, kind: output, shape index: {}]
  %s3 = sld [smem:[#allocation0]]
  $region25: #{multi_lp_jit.1} parent=0
    _
  %s5 = ssub.s32 1, %s3
  %s6 = scalar_select 0, %s5, %s3
  // Predicated region
  $region2: #{multi_lp_jit.1} parent=0 // pred_check
    _
  $region3: #{multi_lp_jit.1} parent=0 // pred_check_branch
    %8 = sbr.rel (0) target = $region5
  $region4: #{multi_lp_jit.1} parent=0 // pred_region
    _
  $region5: #{multi_lp_jit.1} parent=0 // pred_fallthru
    _
  // Predicated region
  $region6: #{multi_lp_jit.1} parent=0 // pred_check
    _
  $region7: #{multi_lp_jit.1} parent=0 // pred_check_branch
    %10 = sbr.rel (0) target = $region9
  $region8: #{multi_lp_jit.1} parent=0 // pred_region
    _
  $region9: #{multi_lp_jit.1} parent=0 // pred_fallthru
    _
  %v12 = vld [vmem:[%s1] sm:$0xff]
  %v13 = vld [vmem:[%s1 + $0x8] sm:$0xff]
  %v14 = vld [vmem:[%s1 + $0x10] sm:$0xff]
  %v15 = vld [vmem:[%s1 + $0x18] sm:$0xff]
  %v16 = vld [vmem:[%s1 + $0x20] sm:$0xff]
  %v17 = vld [vmem:[%s1 + $0x28] sm:$0xff]
  %v18 = vld [vmem:[%s1 + $0x30] sm:$0xff]
  %v19 = vld [vmem:[%s1 + $0x38] sm:$0xff]
  %v20 = vld [vmem:[%s1 + $0x40] sm:$0xff]
  %v21 = vld [vmem:[%s1 + $0x48] sm:$0xff]
  %v22 = vld [vmem:[%s1 + $0x50] sm:$0xff]
  %v23 = vld [vmem:[%s1 + $0x58] sm:$0xff]
  %v24 = vld [vmem:[%s1 + $0x60] sm:$0xff]
  %v25 = vld [vmem:[%s1 + $0x68] sm:$0xff]
  %v26 = vld [vmem:[%s1 + $0x70] sm:$0xff]
  %v27 = vld [vmem:[%s1 + $0x78] sm:$0xff]
  %v28 = vld [vmem:[%s1 + $0x80] sm:$0xff]
  %v29 = vld [vmem:[%s1 + $0x88] sm:$0xff]
  %v30 = vld [vmem:[%s1 + $0x90] sm:$0xff]
  %v31 = vld [vmem:[%s1 + $0x98] sm:$0xff]
  %v32 = vld [vmem:[%s1 + $0xa0] sm:$0xff]
  %v33 = vld [vmem:[%s1 + $0xa8] sm:$0xff]
  %v34 = vld [vmem:[%s1 + $0xb0] sm:$0xff]
  %v35 = vld [vmem:[%s1 + $0xb8] sm:$0xff]
  %v36 = vld [vmem:[%s1 + $0xc0] sm:$0xff]
  %v37 = vld [vmem:[%s1 + $0xc8] sm:$0xff]
  %v38 = vld [vmem:[%s1 + $0xd0] sm:$0xff]
  %v39 = vld [vmem:[%s1 + $0xd8] sm:$0xff]
  %v40 = vld [vmem:[%s1 + $0xe0] sm:$0xff]
  %v41 = vld [vmem:[%s1 + $0xe8] sm:$0xff]
  %v42 = vld [vmem:[%s1 + $0xf0] sm:$0xff]
  %v43 = vld [vmem:[%s1 + $0xf8] sm:$0xff]
  %v44 = vmul.f32 %v12, 0.5
  %v45 = vmul.f32 %v13, 0.5
  %v46 = vmul.f32 %v14, 0.5
  %v47 = vmul.f32 %v15, 0.5
  %v48 = vmul.f32 %v16, 0.5
  %v49 = vmul.f32 %v17, 0.5
  %v50 = vmul.f32 %v18, 0.5
  %v51 = vmul.f32 %v19, 0.5
  %v52 = vmul.f32 %v20, 0.5
  %v53 = vmul.f32 %v21, 0.5
  %v54 = vmul.f32 %v22, 0.5
  %v55 = vmul.f32 %v23, 0.5
  %v56 = vmul.f32 %v24, 0.5
  %v57 = vmul.f32 %v25, 0.5
  %v58 = vmul.f32 %v26, 0.5
  %v59 = vmul.f32 %v27, 0.5
  %v60 = vmul.f32 %v28, 0.5
  %v61 = vmul.f32 %v29, 0.5
  %v62 = vmul.f32 %v30, 0.5
  %v63 = vmul.f32 %v31, 0.5
  %v64 = vmul.f32 %v32, 0.5
  %v65 = vmul.f32 %v33, 0.5
  %v66 = vmul.f32 %v34, 0.5
  %v67 = vmul.f32 %v35, 0.5
  %v68 = vmul.f32 %v36, 0.5
  %v69 = vmul.f32 %v37, 0.5
  %v70 = vmul.f32 %v38, 0.5
  %v71 = vmul.f32 %v39, 0.5
  %v72 = vmul.f32 %v40, 0.5
  %v73 = vmul.f32 %v41, 0.5
  %v74 = vmul.f32 %v42, 0.5
  %v75 = vmul.f32 %v43, 0.5
  loop: start=0, step=1, limit=50
  $region10: #{multi_lp_jit.1} parent=0 // loop_pre_header
    _
  $region11: #{multi_lp_jit.1} parent=0 // loop_header
    %s77 = sphi 0, %s81
    %p78 = scmp.ge.s32.totalorder %s77, 50
    %v82 = vphi %v12, %v692
    %v83 = vphi %v13, %v693
    %v84 = vphi %v14, %v694
    %v85 = vphi %v15, %v695
    %v86 = vphi %v16, %v696
    %v87 = vphi %v17, %v697
    %v88 = vphi %v18, %v698
    %v89 = vphi %v19, %v699
    %v90 = vphi %v20, %v700
    %v91 = vphi %v21, %v701
    %v92 = vphi %v22, %v702
    %v93 = vphi %v23, %v703
    %v94 = vphi %v24, %v704
    %v95 = vphi %v25, %v705
    %v96 = vphi %v26, %v706
    %v97 = vphi %v27, %v707
    %v98 = vphi %v28, %v708
    %v99 = vphi %v29, %v709
    %v100 = vphi %v30, %v710
    %v101 = vphi %v31, %v711
    %v102 = vphi %v32, %v712
    %v103 = vphi %v33, %v713
    %v104 = vphi %v34, %v714
    %v105 = vphi %v35, %v715
    %v106 = vphi %v36, %v716
    %v107 = vphi %v37, %v717
    %v108 = vphi %v38, %v718
    %v109 = vphi %v39, %v719
    %v110 = vphi %v40, %v720
    %v111 = vphi %v41, %v721
    %v112 = vphi %v42, %v722
    %v113 = vphi %v43, %v723
  $region12: #{multi_lp_jit.1} parent=0 // loop_header_branch
    %80 = sbr.rel (%p78) target = $region16
  $region13: #{multi_lp_jit.1} parent=0 // loop_body
    %v114 = vld [vmem:[%s0] sm:$0xff]
    %v115 = vld [vmem:[%s0 + $0x8] sm:$0xff]
    %v116 = vld [vmem:[%s0 + $0x10] sm:$0xff]
    %v117 = vld [vmem:[%s0 + $0x18] sm:$0xff]
    %v118 = vld [vmem:[%s0 + $0x20] sm:$0xff]
    %v119 = vld [vmem:[%s0 + $0x28] sm:$0xff]
    %v120 = vld [vmem:[%s0 + $0x30] sm:$0xff]
    %v121 = vld [vmem:[%s0 + $0x38] sm:$0xff]
    %v122 = vld [vmem:[%s0 + $0x40] sm:$0xff]
    %v123 = vld [vmem:[%s0 + $0x48] sm:$0xff]
    %v124 = vld [vmem:[%s0 + $0x50] sm:$0xff]
    %v125 = vld [vmem:[%s0 + $0x58] sm:$0xff]
    %v126 = vld [vmem:[%s0 + $0x60] sm:$0xff]
    %v127 = vld [vmem:[%s0 + $0x68] sm:$0xff]
    %v128 = vld [vmem:[%s0 + $0x70] sm:$0xff]
    %v129 = vld [vmem:[%s0 + $0x78] sm:$0xff]
    %v130 = vld [vmem:[%s0 + $0x80] sm:$0xff]
    %v131 = vld [vmem:[%s0 + $0x88] sm:$0xff]
    %v132 = vld [vmem:[%s0 + $0x90] sm:$0xff]
    %v133 = vld [vmem:[%s0 + $0x98] sm:$0xff]
    %v134 = vld [vmem:[%s0 + $0xa0] sm:$0xff]
    %v135 = vld [vmem:[%s0 + $0xa8] sm:$0xff]
    %v136 = vld [vmem:[%s0 + $0xb0] sm:$0xff]
    %v137 = vld [vmem:[%s0 + $0xb8] sm:$0xff]
    %v138 = vld [vmem:[%s0 + $0xc0] sm:$0xff]
    %v139 = vld [vmem:[%s0 + $0xc8] sm:$0xff]
    %v140 = vld [vmem:[%s0 + $0xd0] sm:$0xff]
    %v141 = vld [vmem:[%s0 + $0xd8] sm:$0xff]
    %v142 = vld [vmem:[%s0 + $0xe0] sm:$0xff]
    %v143 = vld [vmem:[%s0 + $0xe8] sm:$0xff]
    %v144 = vld [vmem:[%s0 + $0xf0] sm:$0xff]
    %v145 = vld [vmem:[%s0 + $0xf8] sm:$0xff]
    %v146 = vpack.c.bf16 %v83, %v82
    %v147 = vpack.c.bf16 %v85, %v84
    %v148 = vpack.c.bf16 %v87, %v86
    %v149 = vpack.c.bf16 %v89, %v88
    %v150 = vpack.c.bf16 %v91, %v90
    %v151 = vpack.c.bf16 %v93, %v92
    %v152 = vpack.c.bf16 %v95, %v94
    %v153 = vpack.c.bf16 %v97, %v96
    %v154 = vpack.c.bf16 %v99, %v98
    %v155 = vpack.c.bf16 %v101, %v100
    %v156 = vpack.c.bf16 %v103, %v102
    %v157 = vpack.c.bf16 %v105, %v104
    %v158 = vpack.c.bf16 %v107, %v106
    %v159 = vpack.c.bf16 %v109, %v108
    %v160 = vpack.c.bf16 %v111, %v110
    %v161 = vpack.c.bf16 %v113, %v112
    %v194 = vunpack.c.l.b16 %v114
    %v195 = vunpack.c.h.b16 %v114
    %v196 = vunpack.c.l.b16 %v115
    %v197 = vunpack.c.h.b16 %v115
    %v198 = vunpack.c.l.b16 %v116
    %v199 = vunpack.c.h.b16 %v116
    %v200 = vunpack.c.l.b16 %v117
    %v201 = vunpack.c.h.b16 %v117
    %v202 = vunpack.c.l.b16 %v118
    %v203 = vunpack.c.h.b16 %v118
    %v204 = vunpack.c.l.b16 %v119
    %v205 = vunpack.c.h.b16 %v119
    %v206 = vunpack.c.l.b16 %v120
    %v207 = vunpack.c.h.b16 %v120
    %v208 = vunpack.c.l.b16 %v121
    %v209 = vunpack.c.h.b16 %v121
    %v210 = vunpack.c.l.b16 %v122
    %v211 = vunpack.c.h.b16 %v122
    %v212 = vunpack.c.l.b16 %v123
    %v213 = vunpack.c.h.b16 %v123
    %v214 = vunpack.c.l.b16 %v124
    %v215 = vunpack.c.h.b16 %v124
    %v216 = vunpack.c.l.b16 %v125
    %v217 = vunpack.c.h.b16 %v125
    %v218 = vunpack.c.l.b16 %v126
    %v219 = vunpack.c.h.b16 %v126
    %v220 = vunpack.c.l.b16 %v127
    %v221 = vunpack.c.h.b16 %v127
    %v222 = vunpack.c.l.b16 %v128
    %v223 = vunpack.c.h.b16 %v128
    %v224 = vunpack.c.l.b16 %v129
    %v225 = vunpack.c.h.b16 %v129
    %v226 = vunpack.c.l.b16 %v130
    %v227 = vunpack.c.h.b16 %v130
    %v228 = vunpack.c.l.b16 %v131
    %v229 = vunpack.c.h.b16 %v131
    %v230 = vunpack.c.l.b16 %v132
    %v231 = vunpack.c.h.b16 %v132
    %v232 = vunpack.c.l.b16 %v133
    %v233 = vunpack.c.h.b16 %v133
    %v234 = vunpack.c.l.b16 %v134
    %v235 = vunpack.c.h.b16 %v134
    %v236 = vunpack.c.l.b16 %v135
    %v237 = vunpack.c.h.b16 %v135
    %v238 = vunpack.c.l.b16 %v136
    %v239 = vunpack.c.h.b16 %v136
    %v240 = vunpack.c.l.b16 %v137
    %v241 = vunpack.c.h.b16 %v137
    %v242 = vunpack.c.l.b16 %v138
    %v243 = vunpack.c.h.b16 %v138
    %v244 = vunpack.c.l.b16 %v139
    %v245 = vunpack.c.h.b16 %v139
    %v246 = vunpack.c.l.b16 %v140
    %v247 = vunpack.c.h.b16 %v140
    %v248 = vunpack.c.l.b16 %v141
    %v249 = vunpack.c.h.b16 %v141
    %v250 = vunpack.c.l.b16 %v142
    %v251 = vunpack.c.h.b16 %v142
    %v252 = vunpack.c.l.b16 %v143
    %v253 = vunpack.c.h.b16 %v143
    %v254 = vunpack.c.l.b16 %v144
    %v255 = vunpack.c.h.b16 %v144
    %v256 = vunpack.c.l.b16 %v145
    %v257 = vunpack.c.h.b16 %v145
    %v258 = vpack.c.b16 %v196, %v194
    %v259 = vpack.c.b16 %v197, %v195
    %v260 = vpack.c.b16 %v200, %v198
    %v261 = vpack.c.b16 %v201, %v199
    %v262 = vpack.c.b16 %v204, %v202
    %v263 = vpack.c.b16 %v205, %v203
    %v264 = vpack.c.b16 %v208, %v206
    %v265 = vpack.c.b16 %v209, %v207
    %v266 = vpack.c.b16 %v212, %v210
    %v267 = vpack.c.b16 %v213, %v211
    %v268 = vpack.c.b16 %v216, %v214
    %v269 = vpack.c.b16 %v217, %v215
    %v270 = vpack.c.b16 %v220, %v218
    %v271 = vpack.c.b16 %v221, %v219
    %v272 = vpack.c.b16 %v224, %v222
    %v273 = vpack.c.b16 %v225, %v223
    %v274 = vpack.c.b16 %v228, %v226
    %v275 = vpack.c.b16 %v229, %v227
    %v276 = vpack.c.b16 %v232, %v230
    %v277 = vpack.c.b16 %v233, %v231
    %v278 = vpack.c.b16 %v236, %v234
    %v279 = vpack.c.b16 %v237, %v235
    %v280 = vpack.c.b16 %v240, %v238
    %v281 = vpack.c.b16 %v241, %v239
    %v282 = vpack.c.b16 %v244, %v242
    %v283 = vpack.c.b16 %v245, %v243
    %v284 = vpack.c.b16 %v248, %v246
    %v285 = vpack.c.b16 %v249, %v247
    %v286 = vpack.c.b16 %v252, %v250
    %v287 = vpack.c.b16 %v253, %v251
    %v288 = vpack.c.b16 %v256, %v254
    %v289 = vpack.c.b16 %v257, %v255
    %322 = vmatprep.subr.bf16.mxu0 0
    %323 = vmatpush1.bf16.msra.mxu0 %v153
    %324 = vmatprep.subr.bf16.mxu0 0
    %325 = vmatpush1.bf16.msra.mxu0 %v152
    %326 = vmatprep.subr.bf16.mxu0 0
    %327 = vmatpush1.bf16.msra.mxu0 %v151
    %328 = vmatprep.subr.bf16.mxu0 0
    %329 = vmatpush1.bf16.msra.mxu0 %v150
    %330 = vmatprep.subr.bf16.mxu0 0
    %331 = vmatpush1.bf16.msra.mxu0 %v149
    %332 = vmatprep.subr.bf16.mxu0 0
    %333 = vmatpush1.bf16.msra.mxu0 %v148
    %334 = vmatprep.subr.bf16.mxu0 0
    %335 = vmatpush1.bf16.msra.mxu0 %v147
    %336 = vmatprep.subr.bf16.mxu0 0
    %337 = vmatpush1.bf16.msra.mxu0 %v146
    %338 = vmatprep.subr.bf16.mxu0 0
    %339 = vmatpush2.bf16.msra.mxu0 %v161
    %340 = vmatprep.subr.bf16.mxu0 0
    %341 = vmatpush2.bf16.msra.mxu0 %v160
    %342 = vmatprep.subr.bf16.mxu0 0
    %343 = vmatpush2.bf16.msra.mxu0 %v159
    %344 = vmatprep.subr.bf16.mxu0 0
    %345 = vmatpush2.bf16.msra.mxu0 %v158
    %346 = vmatprep.subr.bf16.mxu0 0
    %347 = vmatpush2.bf16.msra.mxu0 %v157
    %348 = vmatprep.subr.bf16.mxu0 0
    %349 = vmatpush2.bf16.msra.mxu0 %v156
    %350 = vmatprep.subr.bf16.mxu0 0
    %351 = vmatpush2.bf16.msra.mxu0 %v155
    %352 = vmatprep.subr.bf16.mxu0 0
    %353 = vmatpush2.bf16.msra.mxu0 %v154
    %354 = vmatprep.mubr.bf16.mxu0 %v259
    %355 = vmatmul.mubr.bf16.gmra.mxu0 %v258
    %v356 = vpop.f32.mrf.mxu0
    %v357 = vadd.f32 0.0, %v356
    %v358 = vpop.f32.mrf.mxu0
    %v359 = vpop.f32.mrf.mxu0
    %v360 = vadd.f32 0.0, %v359
    %v361 = vpop.f32.mrf.mxu0
    %362 = vmatprep.mubr.bf16.mxu0 %v261
    %363 = vmatmul.mubr.bf16.gmra.mxu0 %v260
    %v364 = vpop.f32.mrf.mxu0
    %v365 = vadd.f32 0.0, %v364
    %v366 = vpop.f32.mrf.mxu0
    %v367 = vpop.f32.mrf.mxu0
    %v368 = vadd.f32 0.0, %v367
    %v369 = vpop.f32.mrf.mxu0
    %370 = vmatprep.mubr.bf16.mxu0 %v263
    %371 = vmatmul.mubr.bf16.gmra.mxu0 %v262
    %v372 = vpop.f32.mrf.mxu0
    %v373 = vadd.f32 0.0, %v372
    %v374 = vpop.f32.mrf.mxu0
    %v375 = vpop.f32.mrf.mxu0
    %v376 = vadd.f32 0.0, %v375
    %v377 = vpop.f32.mrf.mxu0
    %378 = vmatprep.mubr.bf16.mxu0 %v265
    %379 = vmatmul.mubr.bf16.gmra.mxu0 %v264
    %v380 = vpop.f32.mrf.mxu0
    %v381 = vadd.f32 0.0, %v380
    %v382 = vpop.f32.mrf.mxu0
    %v383 = vpop.f32.mrf.mxu0
    %v384 = vadd.f32 0.0, %v383
    %v385 = vpop.f32.mrf.mxu0
    %386 = vmatprep.mubr.bf16.mxu0 %v267
    %387 = vmatmul.mubr.bf16.gmra.mxu0 %v266
    %v388 = vpop.f32.mrf.mxu0
    %v389 = vadd.f32 0.0, %v388
    %v390 = vpop.f32.mrf.mxu0
    %v391 = vpop.f32.mrf.mxu0
    %v392 = vadd.f32 0.0, %v391
    %v393 = vpop.f32.mrf.mxu0
    %394 = vmatprep.mubr.bf16.mxu0 %v269
    %395 = vmatmul.mubr.bf16.gmra.mxu0 %v268
    %v396 = vpop.f32.mrf.mxu0
    %v397 = vadd.f32 0.0, %v396
    %v398 = vpop.f32.mrf.mxu0
    %v399 = vpop.f32.mrf.mxu0
    %v400 = vadd.f32 0.0, %v399
    %v401 = vpop.f32.mrf.mxu0
    %402 = vmatprep.mubr.bf16.mxu0 %v271
    %403 = vmatmul.mubr.bf16.gmra.mxu0 %v270
    %v404 = vpop.f32.mrf.mxu0
    %v405 = vadd.f32 0.0, %v404
    %v406 = vpop.f32.mrf.mxu0
    %v407 = vpop.f32.mrf.mxu0
    %v408 = vadd.f32 0.0, %v407
    %v409 = vpop.f32.mrf.mxu0
    %410 = vmatprep.mubr.bf16.mxu0 %v273
    %411 = vmatmul.mubr.bf16.gmra.mxu0 %v272
    %v412 = vpop.f32.mrf.mxu0
    %v413 = vadd.f32 0.0, %v412
    %v414 = vpop.f32.mrf.mxu0
    %v415 = vpop.f32.mrf.mxu0
    %v416 = vadd.f32 0.0, %v415
    %v417 = vpop.f32.mrf.mxu0
    %418 = vmatprep.mubr.bf16.mxu0 %v275
    %419 = vmatmul.mubr.bf16.gmra.mxu0 %v274
    %v420 = vpop.f32.mrf.mxu0
    %v421 = vadd.f32 0.0, %v420
    %v422 = vpop.f32.mrf.mxu0
    %v423 = vpop.f32.mrf.mxu0
    %v424 = vadd.f32 0.0, %v423
    %v425 = vpop.f32.mrf.mxu0
    %426 = vmatprep.mubr.bf16.mxu0 %v277
    %427 = vmatmul.mubr.bf16.gmra.mxu0 %v276
    %v428 = vpop.f32.mrf.mxu0
    %v429 = vadd.f32 0.0, %v428
    %v430 = vpop.f32.mrf.mxu0
    %v431 = vpop.f32.mrf.mxu0
    %v432 = vadd.f32 0.0, %v431
    %v433 = vpop.f32.mrf.mxu0
    %434 = vmatprep.mubr.bf16.mxu0 %v279
    %435 = vmatmul.mubr.bf16.gmra.mxu0 %v278
    %v436 = vpop.f32.mrf.mxu0
    %v437 = vadd.f32 0.0, %v436
    %v438 = vpop.f32.mrf.mxu0
    %v439 = vpop.f32.mrf.mxu0
    %v440 = vadd.f32 0.0, %v439
    %v441 = vpop.f32.mrf.mxu0
    %442 = vmatprep.mubr.bf16.mxu0 %v281
    %443 = vmatmul.mubr.bf16.gmra.mxu0 %v280
    %v444 = vpop.f32.mrf.mxu0
    %v445 = vadd.f32 0.0, %v444
    %v446 = vpop.f32.mrf.mxu0
    %v447 = vpop.f32.mrf.mxu0
    %v448 = vadd.f32 0.0, %v447
    %v449 = vpop.f32.mrf.mxu0
    %450 = vmatprep.mubr.bf16.mxu0 %v283
    %451 = vmatmul.mubr.bf16.gmra.mxu0 %v282
    %v452 = vpop.f32.mrf.mxu0
    %v453 = vadd.f32 0.0, %v452
    %v454 = vpop.f32.mrf.mxu0
    %v455 = vpop.f32.mrf.mxu0
    %v456 = vadd.f32 0.0, %v455
    %v457 = vpop.f32.mrf.mxu0
    %458 = vmatprep.mubr.bf16.mxu0 %v285
    %459 = vmatmul.mubr.bf16.gmra.mxu0 %v284
    %v460 = vpop.f32.mrf.mxu0
    %v461 = vadd.f32 0.0, %v460
    %v462 = vpop.f32.mrf.mxu0
    %v463 = vpop.f32.mrf.mxu0
    %v464 = vadd.f32 0.0, %v463
    %v465 = vpop.f32.mrf.mxu0
    %466 = vmatprep.mubr.bf16.mxu0 %v287
    %467 = vmatmul.mubr.bf16.gmra.mxu0 %v286
    %v468 = vpop.f32.mrf.mxu0
    %v469 = vadd.f32 0.0, %v468
    %v470 = vpop.f32.mrf.mxu0
    %v471 = vpop.f32.mrf.mxu0
    %v472 = vadd.f32 0.0, %v471
    %v473 = vpop.f32.mrf.mxu0
    %474 = vmatprep.mubr.bf16.mxu0 %v289
    %475 = vmatmul.mubr.bf16.gmra.mxu0 %v288
    %v476 = vpop.f32.mrf.mxu0
    %v477 = vadd.f32 0.0, %v476
    %v478 = vpop.f32.mrf.mxu0
    %v479 = vpop.f32.mrf.mxu0
    %v480 = vadd.f32 0.0, %v479
    %v481 = vpop.f32.mrf.mxu0
    %482 = vdwg.mxu0
    %v483 = vpack.c.bf16 %v360, %v357
    %v484 = vpack.c.bf16 %v368, %v365
    %v485 = vpack.c.bf16 %v376, %v373
    %v486 = vpack.c.bf16 %v384, %v381
    %v487 = vpack.c.bf16 %v392, %v389
    %v488 = vpack.c.bf16 %v400, %v397
    %v489 = vpack.c.bf16 %v408, %v405
    %v490 = vpack.c.bf16 %v416, %v413
    %v491 = vpack.c.bf16 %v424, %v421
    %v492 = vpack.c.bf16 %v432, %v429
    %v493 = vpack.c.bf16 %v440, %v437
    %v494 = vpack.c.bf16 %v448, %v445
    %v495 = vpack.c.bf16 %v456, %v453
    %v496 = vpack.c.bf16 %v464, %v461
    %v497 = vpack.c.bf16 %v472, %v469
    %v498 = vpack.c.bf16 %v480, %v477
    %499 = vmatprep.subr.bf16.mxu0 0
    %500 = vmatpush1.bf16.msra.mxu0 %v490
    %501 = vmatprep.subr.bf16.mxu0 0
    %502 = vmatpush1.bf16.msra.mxu0 %v489
    %503 = vmatprep.subr.bf16.mxu0 0
    %504 = vmatpush1.bf16.msra.mxu0 %v488
    %505 = vmatprep.subr.bf16.mxu0 0
    %506 = vmatpush1.bf16.msra.mxu0 %v487
    %507 = vmatprep.subr.bf16.mxu0 0
    %508 = vmatpush1.bf16.msra.mxu0 %v486
    %509 = vmatprep.subr.bf16.mxu0 0
    %510 = vmatpush1.bf16.msra.mxu0 %v485
    %511 = vmatprep.subr.bf16.mxu0 0
    %512 = vmatpush1.bf16.msra.mxu0 %v484
    %513 = vmatprep.subr.bf16.mxu0 0
    %514 = vmatpush1.bf16.msra.mxu0 %v483
    %515 = vmatprep.subr.bf16.mxu0 0
    %516 = vmatpush2.bf16.msra.mxu0 %v498
    %517 = vmatprep.subr.bf16.mxu0 0
    %518 = vmatpush2.bf16.msra.mxu0 %v497
    %519 = vmatprep.subr.bf16.mxu0 0
    %520 = vmatpush2.bf16.msra.mxu0 %v496
    %521 = vmatprep.subr.bf16.mxu0 0
    %522 = vmatpush2.bf16.msra.mxu0 %v495
    %523 = vmatprep.subr.bf16.mxu0 0
    %524 = vmatpush2.bf16.msra.mxu0 %v494
    %525 = vmatprep.subr.bf16.mxu0 0
    %526 = vmatpush2.bf16.msra.mxu0 %v493
    %527 = vmatprep.subr.bf16.mxu0 0
    %528 = vmatpush2.bf16.msra.mxu0 %v492
    %529 = vmatprep.subr.bf16.mxu0 0
    %530 = vmatpush2.bf16.msra.mxu0 %v491
    %531 = vmatprep.mubr.bf16.mxu0 %v259
    %532 = vmatmul.mubr.bf16.gmra.mxu0 %v258
    %v533 = vpop.f32.mrf.mxu0
    %v534 = vadd.f32 0.0, %v533
    %v535 = vpop.f32.mrf.mxu0
    %v536 = vpop.f32.mrf.mxu0
    %v537 = vadd.f32 0.0, %v536
    %v538 = vpop.f32.mrf.mxu0
    %539 = vmatprep.mubr.bf16.mxu0 %v261
    %540 = vmatmul.mubr.bf16.gmra.mxu0 %v260
    %v541 = vpop.f32.mrf.mxu0
    %v542 = vadd.f32 0.0, %v541
    %v543 = vpop.f32.mrf.mxu0
    %v544 = vpop.f32.mrf.mxu0
    %v545 = vadd.f32 0.0, %v544
    %v546 = vpop.f32.mrf.mxu0
    %547 = vmatprep.mubr.bf16.mxu0 %v263
    %548 = vmatmul.mubr.bf16.gmra.mxu0 %v262
    %v549 = vpop.f32.mrf.mxu0
    %v550 = vadd.f32 0.0, %v549
    %v551 = vpop.f32.mrf.mxu0
    %v552 = vpop.f32.mrf.mxu0
    %v553 = vadd.f32 0.0, %v552
    %v554 = vpop.f32.mrf.mxu0
    %555 = vmatprep.mubr.bf16.mxu0 %v265
    %556 = vmatmul.mubr.bf16.gmra.mxu0 %v264
    %v557 = vpop.f32.mrf.mxu0
    %v558 = vadd.f32 0.0, %v557
    %v559 = vpop.f32.mrf.mxu0
    %v560 = vpop.f32.mrf.mxu0
    %v561 = vadd.f32 0.0, %v560
    %v562 = vpop.f32.mrf.mxu0
    %563 = vmatprep.mubr.bf16.mxu0 %v267
    %564 = vmatmul.mubr.bf16.gmra.mxu0 %v266
    %v565 = vpop.f32.mrf.mxu0
    %v566 = vadd.f32 0.0, %v565
    %v567 = vpop.f32.mrf.mxu0
    %v568 = vpop.f32.mrf.mxu0
    %v569 = vadd.f32 0.0, %v568
    %v570 = vpop.f32.mrf.mxu0
    %571 = vmatprep.mubr.bf16.mxu0 %v269
    %572 = vmatmul.mubr.bf16.gmra.mxu0 %v268
    %v573 = vpop.f32.mrf.mxu0
    %v574 = vadd.f32 0.0, %v573
    %v575 = vpop.f32.mrf.mxu0
    %v576 = vpop.f32.mrf.mxu0
    %v577 = vadd.f32 0.0, %v576
    %v578 = vpop.f32.mrf.mxu0
    %579 = vmatprep.mubr.bf16.mxu0 %v271
    %580 = vmatmul.mubr.bf16.gmra.mxu0 %v270
    %v581 = vpop.f32.mrf.mxu0
    %v582 = vadd.f32 0.0, %v581
    %v583 = vpop.f32.mrf.mxu0
    %v584 = vpop.f32.mrf.mxu0
    %v585 = vadd.f32 0.0, %v584
    %v586 = vpop.f32.mrf.mxu0
    %587 = vmatprep.mubr.bf16.mxu0 %v273
    %588 = vmatmul.mubr.bf16.gmra.mxu0 %v272
    %v589 = vpop.f32.mrf.mxu0
    %v590 = vadd.f32 0.0, %v589
    %v591 = vpop.f32.mrf.mxu0
    %v592 = vpop.f32.mrf.mxu0
    %v593 = vadd.f32 0.0, %v592
    %v594 = vpop.f32.mrf.mxu0
    %595 = vmatprep.mubr.bf16.mxu0 %v275
    %596 = vmatmul.mubr.bf16.gmra.mxu0 %v274
    %v597 = vpop.f32.mrf.mxu0
    %v598 = vadd.f32 0.0, %v597
    %v599 = vpop.f32.mrf.mxu0
    %v600 = vpop.f32.mrf.mxu0
    %v601 = vadd.f32 0.0, %v600
    %v602 = vpop.f32.mrf.mxu0
    %603 = vmatprep.mubr.bf16.mxu0 %v277
    %604 = vmatmul.mubr.bf16.gmra.mxu0 %v276
    %v605 = vpop.f32.mrf.mxu0
    %v606 = vadd.f32 0.0, %v605
    %v607 = vpop.f32.mrf.mxu0
    %v608 = vpop.f32.mrf.mxu0
    %v609 = vadd.f32 0.0, %v608
    %v610 = vpop.f32.mrf.mxu0
    %611 = vmatprep.mubr.bf16.mxu0 %v279
    %612 = vmatmul.mubr.bf16.gmra.mxu0 %v278
    %v613 = vpop.f32.mrf.mxu0
    %v614 = vadd.f32 0.0, %v613
    %v615 = vpop.f32.mrf.mxu0
    %v616 = vpop.f32.mrf.mxu0
    %v617 = vadd.f32 0.0, %v616
    %v618 = vpop.f32.mrf.mxu0
    %619 = vmatprep.mubr.bf16.mxu0 %v281
    %620 = vmatmul.mubr.bf16.gmra.mxu0 %v280
    %v621 = vpop.f32.mrf.mxu0
    %v622 = vadd.f32 0.0, %v621
    %v623 = vpop.f32.mrf.mxu0
    %v624 = vpop.f32.mrf.mxu0
    %v625 = vadd.f32 0.0, %v624
    %v626 = vpop.f32.mrf.mxu0
    %627 = vmatprep.mubr.bf16.mxu0 %v283
    %628 = vmatmul.mubr.bf16.gmra.mxu0 %v282
    %v629 = vpop.f32.mrf.mxu0
    %v630 = vadd.f32 0.0, %v629
    %v631 = vpop.f32.mrf.mxu0
    %v632 = vpop.f32.mrf.mxu0
    %v633 = vadd.f32 0.0, %v632
    %v634 = vpop.f32.mrf.mxu0
    %635 = vmatprep.mubr.bf16.mxu0 %v285
    %636 = vmatmul.mubr.bf16.gmra.mxu0 %v284
    %v637 = vpop.f32.mrf.mxu0
    %v638 = vadd.f32 0.0, %v637
    %v639 = vpop.f32.mrf.mxu0
    %v640 = vpop.f32.mrf.mxu0
    %v641 = vadd.f32 0.0, %v640
    %v642 = vpop.f32.mrf.mxu0
    %643 = vmatprep.mubr.bf16.mxu0 %v287
    %644 = vmatmul.mubr.bf16.gmra.mxu0 %v286
    %v645 = vpop.f32.mrf.mxu0
    %v646 = vadd.f32 0.0, %v645
    %v647 = vpop.f32.mrf.mxu0
    %v648 = vpop.f32.mrf.mxu0
    %v649 = vadd.f32 0.0, %v648
    %v650 = vpop.f32.mrf.mxu0
    %651 = vmatprep.mubr.bf16.mxu0 %v289
    %652 = vmatmul.mubr.bf16.gmra.mxu0 %v288
    %v653 = vpop.f32.mrf.mxu0
    %v654 = vadd.f32 0.0, %v653
    %v655 = vpop.f32.mrf.mxu0
    %v656 = vpop.f32.mrf.mxu0
    %v657 = vadd.f32 0.0, %v656
    %v658 = vpop.f32.mrf.mxu0
    %659 = vdwg.mxu0
    %v660 = vmul.f32 %v534, 0.5
    %v661 = vmul.f32 %v537, 0.5
    %v662 = vmul.f32 %v542, 0.5
    %v663 = vmul.f32 %v545, 0.5
    %v664 = vmul.f32 %v550, 0.5
    %v665 = vmul.f32 %v553, 0.5
    %v666 = vmul.f32 %v558, 0.5
    %v667 = vmul.f32 %v561, 0.5
    %v668 = vmul.f32 %v566, 0.5
    %v669 = vmul.f32 %v569, 0.5
    %v670 = vmul.f32 %v574, 0.5
    %v671 = vmul.f32 %v577, 0.5
    %v672 = vmul.f32 %v582, 0.5
    %v673 = vmul.f32 %v585, 0.5
    %v674 = vmul.f32 %v590, 0.5
    %v675 = vmul.f32 %v593, 0.5
    %v676 = vmul.f32 %v598, 0.5
    %v677 = vmul.f32 %v601, 0.5
    %v678 = vmul.f32 %v606, 0.5
    %v679 = vmul.f32 %v609, 0.5
    %v680 = vmul.f32 %v614, 0.5
    %v681 = vmul.f32 %v617, 0.5
    %v682 = vmul.f32 %v622, 0.5
    %v683 = vmul.f32 %v625, 0.5
    %v684 = vmul.f32 %v630, 0.5
    %v685 = vmul.f32 %v633, 0.5
    %v686 = vmul.f32 %v638, 0.5
    %v687 = vmul.f32 %v641, 0.5
    %v688 = vmul.f32 %v646, 0.5
    %v689 = vmul.f32 %v649, 0.5
    %v690 = vmul.f32 %v654, 0.5
    %v691 = vmul.f32 %v657, 0.5
    %v692 = vadd.f32 %v660, %v44
    %v693 = vadd.f32 %v661, %v45
    %v694 = vadd.f32 %v662, %v46
    %v695 = vadd.f32 %v663, %v47
    %v696 = vadd.f32 %v664, %v48
    %v697 = vadd.f32 %v665, %v49
    %v698 = vadd.f32 %v666, %v50
    %v699 = vadd.f32 %v667, %v51
    %v700 = vadd.f32 %v668, %v52
    %v701 = vadd.f32 %v669, %v53
    %v702 = vadd.f32 %v670, %v54
    %v703 = vadd.f32 %v671, %v55
    %v704 = vadd.f32 %v672, %v56
    %v705 = vadd.f32 %v673, %v57
    %v706 = vadd.f32 %v674, %v58
    %v707 = vadd.f32 %v675, %v59
    %v708 = vadd.f32 %v676, %v60
    %v709 = vadd.f32 %v677, %v61
    %v710 = vadd.f32 %v678, %v62
    %v711 = vadd.f32 %v679, %v63
    %v712 = vadd.f32 %v680, %v64
    %v713 = vadd.f32 %v681, %v65
    %v714 = vadd.f32 %v682, %v66
    %v715 = vadd.f32 %v683, %v67
    %v716 = vadd.f32 %v684, %v68
    %v717 = vadd.f32 %v685, %v69
    %v718 = vadd.f32 %v686, %v70
    %v719 = vadd.f32 %v687, %v71
    %v720 = vadd.f32 %v688, %v72
    %v721 = vadd.f32 %v689, %v73
    %v722 = vadd.f32 %v690, %v74
    %v723 = vadd.f32 %v691, %v75
  $region14: #{multi_lp_jit.1} parent=0 // loop_footer
    %s81 = sadd.s32 1, %s77
  $region15: #{multi_lp_jit.1} parent=0 // loop_footer_branch
    %76 = sbr.rel target = $region11
  $region16: #{multi_lp_jit.1} parent=0 // loop_exit
    _
  %724 = vst [vmem:[%s2] sm:$0xff] %v82
  %725 = vst [vmem:[%s2 + $0x8] sm:$0xff] %v83
  %726 = vst [vmem:[%s2 + $0x10] sm:$0xff] %v84
  %727 = vst [vmem:[%s2 + $0x18] sm:$0xff] %v85
  %728 = vst [vmem:[%s2 + $0x20] sm:$0xff] %v86
  %729 = vst [vmem:[%s2 + $0x28] sm:$0xff] %v87
  %730 = vst [vmem:[%s2 + $0x30] sm:$0xff] %v88
  %731 = vst [vmem:[%s2 + $0x38] sm:$0xff] %v89
  %732 = vst [vmem:[%s2 + $0x40] sm:$0xff] %v90
  %733 = vst [vmem:[%s2 + $0x48] sm:$0xff] %v91
  %734 = vst [vmem:[%s2 + $0x50] sm:$0xff] %v92
  %735 = vst [vmem:[%s2 + $0x58] sm:$0xff] %v93
  %736 = vst [vmem:[%s2 + $0x60] sm:$0xff] %v94
  %737 = vst [vmem:[%s2 + $0x68] sm:$0xff] %v95
  %738 = vst [vmem:[%s2 + $0x70] sm:$0xff] %v96
  %739 = vst [vmem:[%s2 + $0x78] sm:$0xff] %v97
  %740 = vst [vmem:[%s2 + $0x80] sm:$0xff] %v98
  %741 = vst [vmem:[%s2 + $0x88] sm:$0xff] %v99
  %742 = vst [vmem:[%s2 + $0x90] sm:$0xff] %v100
  %743 = vst [vmem:[%s2 + $0x98] sm:$0xff] %v101
  %744 = vst [vmem:[%s2 + $0xa0] sm:$0xff] %v102
  %745 = vst [vmem:[%s2 + $0xa8] sm:$0xff] %v103
  %746 = vst [vmem:[%s2 + $0xb0] sm:$0xff] %v104
  %747 = vst [vmem:[%s2 + $0xb8] sm:$0xff] %v105
  %748 = vst [vmem:[%s2 + $0xc0] sm:$0xff] %v106
  %749 = vst [vmem:[%s2 + $0xc8] sm:$0xff] %v107
  %750 = vst [vmem:[%s2 + $0xd0] sm:$0xff] %v108
  %751 = vst [vmem:[%s2 + $0xd8] sm:$0xff] %v109
  %752 = vst [vmem:[%s2 + $0xe0] sm:$0xff] %v110
  %753 = vst [vmem:[%s2 + $0xe8] sm:$0xff] %v111
  %754 = vst [vmem:[%s2 + $0xf0] sm:$0xff] %v112
  %755 = vst [vmem:[%s2 + $0xf8] sm:$0xff] %v113
  // Predicated region
  $region17: #{multi_lp_jit.1} parent=0 // pred_check
    _
  $region18: #{multi_lp_jit.1} parent=0 // pred_check_branch
    %757 = sbr.rel (0) target = $region20
  $region19: #{multi_lp_jit.1} parent=0 // pred_region
    _
  $region20: #{multi_lp_jit.1} parent=0 // pred_fallthru
    _
  // Predicated region
  $region21: #{multi_lp_jit.1} parent=0 // pred_check
    _
  $region22: #{multi_lp_jit.1} parent=0 // pred_check_branch
    %759 = sbr.rel (0) target = $region24
  $region23: #{multi_lp_jit.1} parent=0 // pred_region
    _
  $region24: #{multi_lp_jit.1} parent=0 // pred_fallthru
    _

</llo_original>
